<compile_context>
chip_gen: v7x
topology: tpu7x:2x2x1
jax: 0.10.0
libtpu: 0.0.40
codegen_flags: <defaults>
</compile_context>

<pallas_src>
import functools

import jax
import jax.numpy as jnp
from jax.experimental import pallas as pl
from jax.experimental.pallas import tpu as pltpu


def _round_up(x, m):
    return (x + m - 1) // m * m


# ----------------------------------------------------------------------------- kernels
def _modulator_kernel_resident(z_ref, wz_ref, b_ref, wh_ref, out_ref,
                               *, num_layers, dh_p):
    """All layers in one invocation, all weights resident in VMEM.

    zb = z @ Wz_all + b_all   (one wide matmul, covers every layer's z-path + bias)
    h0 = relu(zb[:, 0:dh_p])
    hl = relu(h_{l-1} @ Wh_l + zb[:, l])   for l >= 1
    """
    z = z_ref[...]                                                       # (1, di_p)
    zb = (jnp.dot(z, wz_ref[...], preferred_element_type=jnp.float32)
          + b_ref[...])                                                  # (1, L*dh_p) f32

    h = jnp.maximum(zb[:, 0:dh_p], 0.0)
    out_ref[pl.ds(0, 1), :] = h

    # num_layers is tiny & static -> fully unrolled; h stays in vregs between layers.
    for l in range(1, num_layers):
        h = jnp.maximum(
            jnp.dot(h.astype(wh_ref.dtype), wh_ref[l - 1],
                    preferred_element_type=jnp.float32)
            + zb[:, l * dh_p:(l + 1) * dh_p],
            0.0)
        out_ref[pl.ds(l, 1), :] = h


def _modulator_kernel_streamed(z_ref, wz_ref, b_ref, wh_hbm, out_ref, wh_buf, sem,
                               *, num_layers, dh_p):
    """Same math, but the (L-1, dh_p, dh_p) Wh slabs stay in HBM and are streamed
    with manual double buffering (layer l+1's slab prefetched behind layer l)."""
    # Prime slab 0 so its DMA overlaps the wide z matmul. (Only called for L > 1.)
    pltpu.make_async_copy(wh_hbm.at[0], wh_buf.at[0], sem.at[0]).start()

    z = z_ref[...]
    zb = (jnp.dot(z, wz_ref[...], preferred_element_type=jnp.float32)
          + b_ref[...])

    h = jnp.maximum(zb[:, 0:dh_p], 0.0)
    out_ref[pl.ds(0, 1), :] = h

    for l in range(1, num_layers):
        slot = (l - 1) & 1
        pltpu.make_async_copy(wh_hbm.at[l - 1], wh_buf.at[slot], sem.at[slot]).wait()
        if l + 1 < num_layers:
            pltpu.make_async_copy(wh_hbm.at[l], wh_buf.at[1 - slot],
                                  sem.at[1 - slot]).start()
        h = jnp.maximum(
            jnp.dot(h.astype(wh_buf.dtype), wh_buf[slot],
                    preferred_element_type=jnp.float32)
            + zb[:, l * dh_p:(l + 1) * dh_p],
            0.0)
        out_ref[pl.ds(l, 1), :] = h


# ------------------------------------------------------------------------ param packing
def pack_modulator_params(params, *, dim_in, dim_hidden, weight_dtype=jnp.float32):
    """One-time packing of torch-layout params ((out_f, in_f), (out_f,)) into the
    padded, pre-transposed tensors the kernel consumes.  Do this once per parameter
    set, NOT per forward call."""
    num_layers = len(params)
    dh_p = _round_up(dim_hidden, 128)
    di_p = _round_up(dim_in, 128)

    # Wz_all: all layers' z->hidden blocks side by side -> one wide matmul in-kernel.
    wz = jnp.zeros((di_p, num_layers * dh_p), weight_dtype)
    b = jnp.zeros((1, num_layers * dh_p), jnp.float32)          # bias stays f32 (acc dtype)
    for l, (w, bias) in enumerate(params):
        wt = w.T                                                # (fan_in, dim_hidden)
        wz_block = wt if l == 0 else wt[dim_hidden:]            # (dim_in, dim_hidden)
        wz = wz.at[:dim_in, l * dh_p:l * dh_p + dim_hidden].set(
            wz_block.astype(weight_dtype))
        b = b.at[0, l * dh_p:l * dh_p + dim_hidden].set(bias.astype(jnp.float32))

    if num_layers > 1:
        wh = jnp.zeros((num_layers - 1, dh_p, dh_p), weight_dtype)
        for l in range(1, num_layers):
            wt = params[l][0].T                                 # (dim_hidden+dim_in, dim_hidden)
            wh = wh.at[l - 1, :dim_hidden, :dim_hidden].set(
                wt[:dim_hidden].astype(weight_dtype))
    else:
        # Never read by the kernel; kept only so both configs share one signature.
        wh = jnp.zeros((1, 8, 128), weight_dtype)

    return {"wz": wz, "b": b, "wh": wh,
            "dim_in": dim_in, "dim_hidden": dim_hidden, "num_layers": num_layers,
            "dh_p": dh_p, "di_p": di_p}


# ------------------------------------------------------------------------------ forward
def _vmem_capacity_bytes():
    try:
        return int(pltpu.get_tpu_info().vmem_capacity_bytes)
    except Exception:
        return 64 * 1024 * 1024          # conservative (v7x per-TC VMEM)


def modulator_forward(z, packed, *, stream_weights=None):
    """z: (dim_in,) f32.  packed: output of pack_modulator_params.
    Returns a tuple of num_layers arrays of shape (dim_hidden,), matching
    Modulator.forward in PyTorch."""
    wz, b, wh = packed["wz"], packed["b"], packed["wh"]
    num_layers = packed["num_layers"]
    dim_in, dim_hidden = packed["dim_in"], packed["dim_hidden"]
    dh_p, di_p = packed["dh_p"], packed["di_p"]
    wdt = wz.dtype
    itemsize = jnp.dtype(wdt).itemsize

    z_p = jnp.zeros((1, di_p), wdt).at[0, :dim_in].set(z.astype(wdt))

    # --- VMEM budgeting / streaming decision (chip-aware) ---
    phys = _vmem_capacity_bytes()
    budget = phys - 8 * 1024 * 1024                    # headroom below physical VMEM
    out_bytes = 4 * num_layers * dh_p
    base_bytes = (z_p.size + wz.size) * itemsize + b.size * 4 + out_bytes
    wh_bytes = wh.size * itemsize

    if stream_weights is None:
        stream_weights = num_layers > 1 and (base_bytes + wh_bytes) > budget // 2
    stream_weights = bool(stream_weights) and num_layers > 1

    resident = base_bytes + (2 * dh_p * dh_p * itemsize if stream_weights else wh_bytes)
    vmem_limit = int(min(budget, max(2 * resident, 32 * 1024 * 1024)))
    cp = pltpu.CompilerParams(vmem_limit_bytes=vmem_limit)

    vmem = pl.BlockSpec(memory_space=pltpu.MemorySpace.VMEM)
    out_shape = jax.ShapeDtypeStruct((num_layers, dh_p), jnp.float32)

    if stream_weights:
        out = pl.pallas_call(
            functools.partial(_modulator_kernel_streamed,
                              num_layers=num_layers, dh_p=dh_p),
            out_shape=out_shape,
            in_specs=[vmem, vmem, vmem, pl.BlockSpec(memory_space=pl.ANY)],
            out_specs=vmem,
            scratch_shapes=[pltpu.VMEM((2, dh_p, dh_p), wdt),
                            pltpu.SemaphoreType.DMA((2,))],
            compiler_params=cp,
        )(z_p, wz, b, wh)
    else:
        out = pl.pallas_call(
            functools.partial(_modulator_kernel_resident,
                              num_layers=num_layers, dh_p=dh_p),
            out_shape=out_shape,
            in_specs=[vmem, vmem, vmem, vmem],
            out_specs=vmem,
            compiler_params=cp,
        )(z_p, wz, b, wh)

    out = out[:, :dim_hidden]                          # strip lane padding on the host
    return tuple(out[l] for l in range(num_layers))


# ---------------------------------------------------------------------- init & reference
def init_params(key, dim_in, dim_hidden, num_layers):
    """nn.Linear default init: U(-1/sqrt(fan_in), 1/sqrt(fan_in)), torch (out,in) layout."""
    params = []
    for ind in range(num_layers):
        fan_in = dim_in if ind == 0 else dim_hidden + dim_in
        key, kw, kb = jax.random.split(key, 3)
        bound = 1.0 / (fan_in ** 0.5)
        w = jax.random.uniform(kw, (dim_hidden, fan_in), jnp.float32, -bound, bound)
        bb = jax.random.uniform(kb, (dim_hidden,), jnp.float32, -bound, bound)
        params.append((w, bb))
    return params


def modulator_ref(z, params, weight_dtype=jnp.float32):
    """Plain-JAX mirror of the PyTorch forward (optionally with weights cast to
    weight_dtype and f32 accumulation, matching the kernel's bf16 mode)."""
    x = z
    hiddens = []
    for w, bias in params:
        h = jnp.maximum(
            jnp.dot(x.astype(weight_dtype), w.T.astype(weight_dtype),
                    preferred_element_type=jnp.float32) + bias,
            0.0)
        hiddens.append(h)
        x = jnp.concatenate([h, z])
    return tuple(hiddens)


# ----------------------------------------------------------------------------------- main
if __name__ == "__main__":
    dim_in, dim_hidden, num_layers = 16, 32, 3

    key = jax.random.PRNGKey(0)
    key, kz = jax.random.split(key)
    z = jax.random.normal(kz, (dim_in,), jnp.float32)
    params = init_params(key, dim_in, dim_hidden, num_layers)

    # 1) f32 weights, fully-resident path.
    packed_f32 = pack_modulator_params(params, dim_in=dim_in, dim_hidden=dim_hidden)
    got = jax.block_until_ready(modulator_forward(z, packed_f32))
    want = modulator_ref(z, params)
    for g, w in zip(got, want):
        assert g.shape == (dim_hidden,)
        assert jnp.allclose(g, w, atol=1e-5, rtol=1e-5), "f32 resident mismatch"

    # 2) f32 weights, streamed (double-buffered Wh DMA) path forced on.
    got_s = jax.block_until_ready(modulator_forward(z, packed_f32, stream_weights=True))
    for g, w in zip(got_s, want):
        assert jnp.allclose(g, w, atol=1e-5, rtol=1e-5), "f32 streamed mismatch"

    # 3) bf16 weights/activations with f32 accumulation.
    packed_bf16 = pack_modulator_params(params, dim_in=dim_in, dim_hidden=dim_hidden,
                                        weight_dtype=jnp.bfloat16)
    got_b = jax.block_until_ready(modulator_forward(z, packed_bf16))
    want_b = modulator_ref(z, params, weight_dtype=jnp.bfloat16)
    for g, w in zip(got_b, want_b):
        assert jnp.allclose(g, w, atol=1e-4, rtol=1e-3), "bf16 mismatch"

    # 4) num_layers == 1 edge case (no hidden->hidden weights at all).
    params1 = init_params(jax.random.PRNGKey(1), dim_in, dim_hidden, 1)
    packed1 = pack_modulator_params(params1, dim_in=dim_in, dim_hidden=dim_hidden)
    got1 = jax.block_until_ready(modulator_forward(z, packed1))
    want1 = modulator_ref(z, params1)
    assert jnp.allclose(got1[0], want1[0], atol=1e-5, rtol=1e-5), "L=1 mismatch"

    print("KERNEL_OK")
</pallas_src>

<mosaic_0001>
module attributes {stable_mosaic.version = 11 : i64} {
  func.func @_modulator_kernel_resident(%arg0: memref<1x128xf32, #tpu.memory_space<vmem>>, %arg1: memref<128x384xf32, #tpu.memory_space<vmem>>, %arg2: memref<1x384xf32, #tpu.memory_space<vmem>>, %arg3: memref<2x128x128xf32, #tpu.memory_space<vmem>>, %arg4: memref<3x128xf32, #tpu.memory_space<vmem>>) attributes {dimension_semantics = [], scalar_prefetch = 0 : i64, scratch_operands = 0 : i64, tpu.core_type = #tpu.core_type<tc>} {
    %c0 = arith.constant 0 : index
    %c0_0 = arith.constant 0 : index
    %0 = vector.load %arg0[%c0, %c0_0] : memref<1x128xf32, #tpu.memory_space<vmem>>, vector<1x128xf32>
    %c0_1 = arith.constant 0 : index
    %c0_2 = arith.constant 0 : index
    %1 = vector.load %arg1[%c0_1, %c0_2] : memref<128x384xf32, #tpu.memory_space<vmem>>, vector<128x384xf32>
    %cst = arith.constant dense<0.000000e+00> : vector<1x384xf32>
    %2 = tpu.matmul %0, %1, %cst {dimension_numbers = #tpu.dot_dimension_numbers<[1], [0], [0], [1], [0, 0, 1, 1], [], []>} : vector<1x128xf32>, vector<128x384xf32>, vector<1x384xf32> -> vector<1x384xf32>
    %c0_3 = arith.constant 0 : index
    %c0_4 = arith.constant 0 : index
    %3 = vector.load %arg2[%c0_3, %c0_4] : memref<1x384xf32, #tpu.memory_space<vmem>>, vector<1x384xf32>
    %4 = arith.addf %2, %3 : vector<1x384xf32>
    %5 = vector.extract_strided_slice %4 {offsets = [0, 0], sizes = [1, 128], strides = [1, 1]} : vector<1x384xf32> to vector<1x128xf32>
    %cst_5 = arith.constant 0.000000e+00 : f32
    %6 = vector.broadcast %cst_5 : f32 to vector<1x128xf32>
    %7 = arith.maximumf %5, %6 : vector<1x128xf32>
    %c0_6 = arith.constant 0 : index
    %c0_7 = arith.constant 0 : index
    %8 = vector.load %arg4[%c0_6, %c0_7] : memref<3x128xf32, #tpu.memory_space<vmem>>, vector<1x128xf32>
    tpu.vector_store %arg4[%c0_6, %c0_7], %7 {strides = array<i32>} : memref<3x128xf32, #tpu.memory_space<vmem>>, vector<1x128xf32>,
    %c0_8 = arith.constant 0 : index
    %c0_9 = arith.constant 0 : index
    %c0_10 = arith.constant 0 : index
    %9 = vector.load %arg3[%c0_8, %c0_9, %c0_10] : memref<2x128x128xf32, #tpu.memory_space<vmem>>, vector<1x128x128xf32>
    %10 = vector.shape_cast %9 : vector<1x128x128xf32> to vector<128x128xf32>
    %cst_11 = arith.constant dense<0.000000e+00> : vector<1x128xf32>
    %11 = tpu.matmul %7, %10, %cst_11 {dimension_numbers = #tpu.dot_dimension_numbers<[1], [0], [0], [1], [0, 0, 1, 1], [], []>} : vector<1x128xf32>, vector<128x128xf32>, vector<1x128xf32> -> vector<1x128xf32>
    %12 = vector.extract_strided_slice %4 {offsets = [0, 128], sizes = [1, 128], strides = [1, 1]} : vector<1x384xf32> to vector<1x128xf32>
    %13 = arith.addf %11, %12 : vector<1x128xf32>
    %cst_12 = arith.constant 0.000000e+00 : f32
    %14 = vector.broadcast %cst_12 : f32 to vector<1x128xf32>
    %15 = arith.maximumf %13, %14 : vector<1x128xf32>
    %c1 = arith.constant 1 : index
    %c0_13 = arith.constant 0 : index
    %16 = vector.load %arg4[%c1, %c0_13] : memref<3x128xf32, #tpu.memory_space<vmem>>, vector<1x128xf32>
    tpu.vector_store %arg4[%c1, %c0_13], %15 {strides = array<i32>} : memref<3x128xf32, #tpu.memory_space<vmem>>, vector<1x128xf32>,
    %c1_14 = arith.constant 1 : index
    %c0_15 = arith.constant 0 : index
    %c0_16 = arith.constant 0 : index
    %17 = vector.load %arg3[%c1_14, %c0_15, %c0_16] : memref<2x128x128xf32, #tpu.memory_space<vmem>>, vector<1x128x128xf32>
    %18 = vector.shape_cast %17 : vector<1x128x128xf32> to vector<128x128xf32>
    %cst_17 = arith.constant dense<0.000000e+00> : vector<1x128xf32>
    %19 = tpu.matmul %15, %18, %cst_17 {dimension_numbers = #tpu.dot_dimension_numbers<[1], [0], [0], [1], [0, 0, 1, 1], [], []>} : vector<1x128xf32>, vector<128x128xf32>, vector<1x128xf32> -> vector<1x128xf32>
    %20 = vector.extract_strided_slice %4 {offsets = [0, 256], sizes = [1, 128], strides = [1, 1]} : vector<1x384xf32> to vector<1x128xf32>
    %21 = arith.addf %19, %20 : vector<1x128xf32>
    %cst_18 = arith.constant 0.000000e+00 : f32
    %22 = vector.broadcast %cst_18 : f32 to vector<1x128xf32>
    %23 = arith.maximumf %21, %22 : vector<1x128xf32>
    %c2 = arith.constant 2 : index
    %c0_19 = arith.constant 0 : index
    %24 = vector.load %arg4[%c2, %c0_19] : memref<3x128xf32, #tpu.memory_space<vmem>>, vector<1x128xf32>
    tpu.vector_store %arg4[%c2, %c0_19], %23 {strides = array<i32>} : memref<3x128xf32, #tpu.memory_space<vmem>>, vector<1x128xf32>,
    return
  }
}

</mosaic_0001>

<llo_original>
// kernel: tpu_custom_call.1
$region0: #{tpu_custom_call.1}
  #allocation0 [shape = 'u32[]', space=smem, size = 0x4, offset = 0x4, fixed_abs, tag = 'smem constant byte address 0x4 - core index']
  #allocation1 [shape = 'u32[144,128]{1,0:T(1,128)}', space=vmem, size = 0x12000, scoped, tag = 'internal scratch']
  %s0 = inlined_call_operand.hbm [shape: f32[1,128], index: 0, kind: input, shape index: {}]
  %s1 = inlined_call_operand.hbm [shape: f32[128,384], index: 1, kind: input, shape index: {}]
  %s2 = inlined_call_operand.vmem [shape: f32[1,384], index: 2, kind: input, shape index: {}]
  %s3 = inlined_call_operand.hbm [shape: f32[2,128,128], index: 3, kind: input, shape index: {}]
  %s4 = inlined_call_operand.hbm [shape: f32[3,128], index: 4, kind: output, shape index: {}]
  %s5 = sld [smem:[#allocation0]]
  $region38: #{tpu_custom_call.1} parent=0
    _
  %s7 = ssub.s32 1, %s5
  %s8 = scalar_select 0, %s7, %s5
  $region1: #{tpu_custom_call.1} parent=0
    #allocation2 [shape = 'u8[512]{0}', space=vmem, size = 0x400, scoped, tag = 'input window, operand 0, single buffered']
    #allocation3 [shape = 's32[1]{0}', space=sflag, size = 0x4, scoped, tag = 'scoped memory for tpu_custom_call.1']
    #allocation4 [shape = 's32[1]{0}', space=sflag, size = 0x4, scoped, tag = 'scoped memory for tpu_custom_call.1']
    #allocation5 [shape = 'u8[196608]{0}', space=vmem, size = 0x30000, scoped, tag = 'input window, operand 1, single buffered']
    #allocation6 [shape = 's32[1]{0}', space=sflag, size = 0x4, scoped, tag = 'scoped memory for tpu_custom_call.1']
    #allocation7 [shape = 'u8[131072]{0}', space=vmem, size = 0x20000, scoped, tag = 'input window, operand 3, single buffered']
    #allocation8 [shape = 'u8[2048]{0}', space=vmem, size = 0x800, scoped, tag = 'output window, operand 0, single buffered']
    %9 = vsyncpa [#allocation3], 0
    %10 = vsyncpa [#allocation6], 0
    %11 = vsyncpa [#allocation4], 0
    // Predicated region
    $region2: #{tpu_custom_call.1} parent=1 // pred_check
      _
    $region3: #{tpu_custom_call.1} parent=1 // pred_check_branch
      %13 = sbr.rel (0) target = $region5
    $region4: #{tpu_custom_call.1} parent=1 // pred_region
      %s15 = ssub.s32 16, 16
      %16 = vsyncadd [#allocation3], %s15
      %s18 = sshll.u32 [#allocation2], 4
      %s19 = int_to_ptr.vmem [resolvable:$true] %s18
      %21 = dma.hbm_to_vmem [thread:$0]  %s0, 16, %s19, [#allocation3]
    $region5: #{tpu_custom_call.1} parent=1 // pred_fallthru
      _
    // Predicated region
    $region6: #{tpu_custom_call.1} parent=1 // pred_check
      _
    $region7: #{tpu_custom_call.1} parent=1 // pred_check_branch
      %23 = sbr.rel (0) target = $region9
    $region8: #{tpu_custom_call.1} parent=1 // pred_region
      %s25 = ssub.s32 6144, 6144
      %26 = vsyncadd [#allocation6], %s25
      %s27 = sshll.u32 [#allocation5], 4
      %s28 = int_to_ptr.vmem [resolvable:$true] %s27
      %33 = dma.hbm_to_vmem [thread:$0]  %s1, 6144, %s28, [#allocation6], 384, 384, 24
    $region9: #{tpu_custom_call.1} parent=1 // pred_fallthru
      _
    // Predicated region
    $region10: #{tpu_custom_call.1} parent=1 // pred_check
      _
    $region11: #{tpu_custom_call.1} parent=1 // pred_check_branch
      %35 = sbr.rel (0) target = $region13
    $region12: #{tpu_custom_call.1} parent=1 // pred_region
      _
    $region13: #{tpu_custom_call.1} parent=1 // pred_fallthru
      _
    // Predicated region
    $region14: #{tpu_custom_call.1} parent=1 // pred_check
      _
    $region15: #{tpu_custom_call.1} parent=1 // pred_check_branch
      %37 = sbr.rel (0) target = $region17
    $region16: #{tpu_custom_call.1} parent=1 // pred_region
      %s39 = ssub.s32 4096, 4096
      %40 = vsyncadd [#allocation6], %s39
      %s41 = sshll.u32 [#allocation7], 4
      %s42 = int_to_ptr.vmem [resolvable:$true] %s41
      %47 = dma.hbm_to_vmem [thread:$0]  %s3, 4096, %s42, [#allocation6], 128, 128, 8
    $region17: #{tpu_custom_call.1} parent=1 // pred_fallthru
      _
    // Predicated region
    $region18: #{tpu_custom_call.1} parent=1 // pred_check
      _
    $region19: #{tpu_custom_call.1} parent=1 // pred_check_branch
      %49 = sbr.rel (0) target = $region21
    $region20: #{tpu_custom_call.1} parent=1 // pred_region
      %50 = dma.done [#allocation3], 16
    $region21: #{tpu_custom_call.1} parent=1 // pred_fallthru
      _
    // Predicated region
    $region22: #{tpu_custom_call.1} parent=1 // pred_check
      _
    $region23: #{tpu_custom_call.1} parent=1 // pred_check_branch
      %52 = sbr.rel (0) target = $region25
    $region24: #{tpu_custom_call.1} parent=1 // pred_region
      %53 = dma.done [#allocation6], 6144
    $region25: #{tpu_custom_call.1} parent=1 // pred_fallthru
      _
    // Predicated region
    $region26: #{tpu_custom_call.1} parent=1 // pred_check
      _
    $region27: #{tpu_custom_call.1} parent=1 // pred_check_branch
      %55 = sbr.rel (0) target = $region29
    $region28: #{tpu_custom_call.1} parent=1 // pred_region
      %56 = dma.done [#allocation6], 4096
    $region29: #{tpu_custom_call.1} parent=1 // pred_fallthru
      _
    %v57 = vld [vmem:[#allocation2] sm:$0x1]
    %v58 = vld [vmem:[#allocation5] sm:$0xff]
    %v59 = vld [vmem:[#allocation5 + $0x8] sm:$0xff]
    %v60 = vld [vmem:[#allocation5 + $0x10] sm:$0xff]
    %v61 = vld [vmem:[#allocation5 + $0x18] sm:$0xff]
    %v62 = vld [vmem:[#allocation5 + $0x20] sm:$0xff]
    %v63 = vld [vmem:[#allocation5 + $0x28] sm:$0xff]
    %v64 = vld [vmem:[#allocation5 + $0x30] sm:$0xff]
    %v65 = vld [vmem:[#allocation5 + $0x38] sm:$0xff]
    %v66 = vld [vmem:[#allocation5 + $0x40] sm:$0xff]
    %v67 = vld [vmem:[#allocation5 + $0x48] sm:$0xff]
    %v68 = vld [vmem:[#allocation5 + $0x50] sm:$0xff]
    %v69 = vld [vmem:[#allocation5 + $0x58] sm:$0xff]
    %v70 = vld [vmem:[#allocation5 + $0x60] sm:$0xff]
    %v71 = vld [vmem:[#allocation5 + $0x68] sm:$0xff]
    %v72 = vld [vmem:[#allocation5 + $0x70] sm:$0xff]
    %v73 = vld [vmem:[#allocation5 + $0x78] sm:$0xff]
    %v74 = vld [vmem:[#allocation5 + $0x80] sm:$0xff]
    %v75 = vld [vmem:[#allocation5 + $0x88] sm:$0xff]
    %v76 = vld [vmem:[#allocation5 + $0x90] sm:$0xff]
    %v77 = vld [vmem:[#allocation5 + $0x98] sm:$0xff]
    %v78 = vld [vmem:[#allocation5 + $0xa0] sm:$0xff]
    %v79 = vld [vmem:[#allocation5 + $0xa8] sm:$0xff]
    %v80 = vld [vmem:[#allocation5 + $0xb0] sm:$0xff]
    %v81 = vld [vmem:[#allocation5 + $0xb8] sm:$0xff]
    %v82 = vld [vmem:[#allocation5 + $0xc0] sm:$0xff]
    %v83 = vld [vmem:[#allocation5 + $0xc8] sm:$0xff]
    %v84 = vld [vmem:[#allocation5 + $0xd0] sm:$0xff]
    %v85 = vld [vmem:[#allocation5 + $0xd8] sm:$0xff]
    %v86 = vld [vmem:[#allocation5 + $0xe0] sm:$0xff]
    %v87 = vld [vmem:[#allocation5 + $0xe8] sm:$0xff]
    %v88 = vld [vmem:[#allocation5 + $0xf0] sm:$0xff]
    %v89 = vld [vmem:[#allocation5 + $0xf8] sm:$0xff]
    %v90 = vld [vmem:[#allocation5 + $0x100] sm:$0xff]
    %v91 = vld [vmem:[#allocation5 + $0x108] sm:$0xff]
    %v92 = vld [vmem:[#allocation5 + $0x110] sm:$0xff]
    %v93 = vld [vmem:[#allocation5 + $0x118] sm:$0xff]
    %v94 = vld [vmem:[#allocation5 + $0x120] sm:$0xff]
    %v95 = vld [vmem:[#allocation5 + $0x128] sm:$0xff]
    %v96 = vld [vmem:[#allocation5 + $0x130] sm:$0xff]
    %v97 = vld [vmem:[#allocation5 + $0x138] sm:$0xff]
    %v98 = vld [vmem:[#allocation5 + $0x140] sm:$0xff]
    %v99 = vld [vmem:[#allocation5 + $0x148] sm:$0xff]
    %v100 = vld [vmem:[#allocation5 + $0x150] sm:$0xff]
    %v101 = vld [vmem:[#allocation5 + $0x158] sm:$0xff]
    %v102 = vld [vmem:[#allocation5 + $0x160] sm:$0xff]
    %v103 = vld [vmem:[#allocation5 + $0x168] sm:$0xff]
    %v104 = vld [vmem:[#allocation5 + $0x170] sm:$0xff]
    %v105 = vld [vmem:[#allocation5 + $0x178] sm:$0xff]
    %v106 = vld [vmem:[%s2] sm:$0x7]
    %v108 = vlaneseq
    %v109 = vshrl.u32 %v108, 7
    %v110 = vsub.s32 0, %v109
    %v111 = vrot.slane %v106, %v110
    %v112 = vlaneseq
    %v113 = vshrl.u32 %v112, 7
    %v114 = vsub.s32 1, %v113
    %v115 = vrot.slane %v106, %v114
    %v116 = vlaneseq
    %v117 = vshrl.u32 %v116, 7
    %v118 = vsub.s32 2, %v117
    %v119 = vrot.slane %v106, %v118
    %123 = vmatprep.subr.mxu0 %v59
    %124 = vmatpush1.msra.mxu0 %v58
    %125 = vmatprep.subr.mxu0 %v62
    %126 = vmatpush1.msra.mxu0 %v61
    %127 = vmatprep.subr.mxu0 %v65
    %128 = vmatpush1.msra.mxu0 %v64
    %129 = vmatprep.subr.mxu0 %v68
    %130 = vmatpush1.msra.mxu0 %v67
    %131 = vmatprep.subr.mxu0 %v71
    %132 = vmatpush1.msra.mxu0 %v70
    %133 = vmatprep.subr.mxu0 %v74
    %134 = vmatpush1.msra.mxu0 %v73
    %135 = vmatprep.subr.mxu0 %v77
    %136 = vmatpush1.msra.mxu0 %v76
    %137 = vmatprep.subr.mxu0 %v80
    %138 = vmatpush1.msra.mxu0 %v79
    %139 = vmatprep.subr.mxu0 %v83
    %140 = vmatpush1.msra.mxu0 %v82
    %141 = vmatprep.subr.mxu0 %v86
    %142 = vmatpush1.msra.mxu0 %v85
    %143 = vmatprep.subr.mxu0 %v89
    %144 = vmatpush1.msra.mxu0 %v88
    %145 = vmatprep.subr.mxu0 %v92
    %146 = vmatpush1.msra.mxu0 %v91
    %147 = vmatprep.subr.mxu0 %v95
    %148 = vmatpush1.msra.mxu0 %v94
    %149 = vmatprep.subr.mxu0 %v98
    %150 = vmatpush1.msra.mxu0 %v97
    %151 = vmatprep.subr.mxu0 %v101
    %152 = vmatpush1.msra.mxu0 %v100
    %153 = vmatprep.subr.mxu0 %v104
    %154 = vmatpush1.msra.mxu0 %v103
    %155 = vmatprep.subr.mxu0 0.0
    %156 = vmatpush1.msra.mxu0 0.0
    %157 = vmatprep.subr.mxu0 0.0
    %158 = vmatpush1.msra.mxu0 0.0
    %159 = vmatprep.subr.mxu0 0.0
    %160 = vmatpush1.msra.mxu0 0.0
    %161 = vmatprep.subr.mxu0 0.0
    %162 = vmatpush1.msra.mxu0 0.0
    %163 = vmatprep.subr.mxu0 0.0
    %164 = vmatpush1.msra.mxu0 0.0
    %165 = vmatprep.subr.mxu0 0.0
    %166 = vmatpush1.msra.mxu0 0.0
    %167 = vmatprep.subr.mxu0 0.0
    %168 = vmatpush1.msra.mxu0 0.0
    %169 = vmatprep.subr.mxu0 0.0
    %170 = vmatpush1.msra.mxu0 0.0
    %171 = vmatprep.subr.mxu0 0.0
    %172 = vmatpush1.msra.mxu0 0.0
    %173 = vmatprep.subr.mxu0 0.0
    %174 = vmatpush1.msra.mxu0 0.0
    %175 = vmatprep.subr.mxu0 0.0
    %176 = vmatpush1.msra.mxu0 0.0
    %177 = vmatprep.subr.mxu0 0.0
    %178 = vmatpush1.msra.mxu0 0.0
    %179 = vmatprep.subr.mxu0 0.0
    %180 = vmatpush1.msra.mxu0 0.0
    %181 = vmatprep.subr.mxu0 0.0
    %182 = vmatpush1.msra.mxu0 0.0
    %183 = vmatprep.subr.mxu0 0.0
    %184 = vmatpush1.msra.mxu0 0.0
    %185 = vmatprep.subr.mxu0 0.0
    %186 = vmatpush1.msra.mxu0 0.0
    %187 = vmatprep.mubr.f32.mxu0 0.0
    %188 = vmatmul.mubr.f32.gmra.mrb[0].mxu0 %v57
    %v189 = vpop.f32.mrb[0].mxu0
    %v190 = vadd.f32 %v111, %v189
    %v191 = vpop.f32.mrb[0].mxu0
    %v192 = vadd.f32 %v115, %v191
    %193 = vdwg.mxu0
    %194 = vmatprep.subr.mxu0 0.0
    %195 = vmatpush1.msra.mxu0 %v60
    %196 = vmatprep.subr.mxu0 0.0
    %197 = vmatpush1.msra.mxu0 %v63
    %198 = vmatprep.subr.mxu0 0.0
    %199 = vmatpush1.msra.mxu0 %v66
    %200 = vmatprep.subr.mxu0 0.0
    %201 = vmatpush1.msra.mxu0 %v69
    %202 = vmatprep.subr.mxu0 0.0
    %203 = vmatpush1.msra.mxu0 %v72
    %204 = vmatprep.subr.mxu0 0.0
    %205 = vmatpush1.msra.mxu0 %v75
    %206 = vmatprep.subr.mxu0 0.0
    %207 = vmatpush1.msra.mxu0 %v78
    %208 = vmatprep.subr.mxu0 0.0
    %209 = vmatpush1.msra.mxu0 %v81
    %210 = vmatprep.subr.mxu0 0.0
    %211 = vmatpush1.msra.mxu0 %v84
    %212 = vmatprep.subr.mxu0 0.0
    %213 = vmatpush1.msra.mxu0 %v87
    %214 = vmatprep.subr.mxu0 0.0
    %215 = vmatpush1.msra.mxu0 %v90
    %216 = vmatprep.subr.mxu0 0.0
    %217 = vmatpush1.msra.mxu0 %v93
    %218 = vmatprep.subr.mxu0 0.0
    %219 = vmatpush1.msra.mxu0 %v96
    %220 = vmatprep.subr.mxu0 0.0
    %221 = vmatpush1.msra.mxu0 %v99
    %222 = vmatprep.subr.mxu0 0.0
    %223 = vmatpush1.msra.mxu0 %v102
    %224 = vmatprep.subr.mxu0 0.0
    %225 = vmatpush1.msra.mxu0 %v105
    %226 = vmatprep.subr.mxu0 0.0
    %227 = vmatpush1.msra.mxu0 0.0
    %228 = vmatprep.subr.mxu0 0.0
    %229 = vmatpush1.msra.mxu0 0.0
    %230 = vmatprep.subr.mxu0 0.0
    %231 = vmatpush1.msra.mxu0 0.0
    %232 = vmatprep.subr.mxu0 0.0
    %233 = vmatpush1.msra.mxu0 0.0
    %234 = vmatprep.subr.mxu0 0.0
    %235 = vmatpush1.msra.mxu0 0.0
    %236 = vmatprep.subr.mxu0 0.0
    %237 = vmatpush1.msra.mxu0 0.0
    %238 = vmatprep.subr.mxu0 0.0
    %239 = vmatpush1.msra.mxu0 0.0
    %240 = vmatprep.subr.mxu0 0.0
    %241 = vmatpush1.msra.mxu0 0.0
    %242 = vmatprep.subr.mxu0 0.0
    %243 = vmatpush1.msra.mxu0 0.0
    %244 = vmatprep.subr.mxu0 0.0
    %245 = vmatpush1.msra.mxu0 0.0
    %246 = vmatprep.subr.mxu0 0.0
    %247 = vmatpush1.msra.mxu0 0.0
    %248 = vmatprep.subr.mxu0 0.0
    %249 = vmatpush1.msra.mxu0 0.0
    %250 = vmatprep.subr.mxu0 0.0
    %251 = vmatpush1.msra.mxu0 0.0
    %252 = vmatprep.subr.mxu0 0.0
    %253 = vmatpush1.msra.mxu0 0.0
    %254 = vmatprep.subr.mxu0 0.0
    %255 = vmatpush1.msra.mxu0 0.0
    %256 = vmatprep.subr.mxu0 0.0
    %257 = vmatpush1.msra.mxu0 0.0
    %258 = vmatprep.mubr.f32.mxu0 0.0
    %259 = vmatmul.mubr.f32.gmra.mrb[0].mxu0 %v57
    %v260 = vpop.f32.mrb[0].mxu0
    %v261 = vadd.f32 %v119, %v260
    %v262 = vpop.f32.mrb[0].mxu0
    %263 = vdwg.mxu0
    %v264 = vmax.f32 %v190, 0.0
    %265 = vst [vmem:[#allocation8] sm:$0x1] %v264
    %v266 = vld [vmem:[#allocation7] sm:$0xff]
    %v267 = vld [vmem:[#allocation7 + $0x8] sm:$0xff]
    %v268 = vld [vmem:[#allocation7 + $0x10] sm:$0xff]
    %v269 = vld [vmem:[#allocation7 + $0x18] sm:$0xff]
    %v270 = vld [vmem:[#allocation7 + $0x20] sm:$0xff]
    %v271 = vld [vmem:[#allocation7 + $0x28] sm:$0xff]
    %v272 = vld [vmem:[#allocation7 + $0x30] sm:$0xff]
    %v273 = vld [vmem:[#allocation7 + $0x38] sm:$0xff]
    %v274 = vld [vmem:[#allocation7 + $0x40] sm:$0xff]
    %v275 = vld [vmem:[#allocation7 + $0x48] sm:$0xff]
    %v276 = vld [vmem:[#allocation7 + $0x50] sm:$0xff]
    %v277 = vld [vmem:[#allocation7 + $0x58] sm:$0xff]
    %v278 = vld [vmem:[#allocation7 + $0x60] sm:$0xff]
    %v279 = vld [vmem:[#allocation7 + $0x68] sm:$0xff]
    %v280 = vld [vmem:[#allocation7 + $0x70] sm:$0xff]
    %v281 = vld [vmem:[#allocation7 + $0x78] sm:$0xff]
    %282 = vmatprep.subr.mxu0 0.0
    %283 = vmatpush1.msra.mxu0 %v266
    %284 = vmatprep.subr.mxu0 0.0
    %285 = vmatpush1.msra.mxu0 %v267
    %286 = vmatprep.subr.mxu0 0.0
    %287 = vmatpush1.msra.mxu0 %v268
    %288 = vmatprep.subr.mxu0 0.0
    %289 = vmatpush1.msra.mxu0 %v269
    %290 = vmatprep.subr.mxu0 0.0
    %291 = vmatpush1.msra.mxu0 %v270
    %292 = vmatprep.subr.mxu0 0.0
    %293 = vmatpush1.msra.mxu0 %v271
    %294 = vmatprep.subr.mxu0 0.0
    %295 = vmatpush1.msra.mxu0 %v272
    %296 = vmatprep.subr.mxu0 0.0
    %297 = vmatpush1.msra.mxu0 %v273
    %298 = vmatprep.subr.mxu0 0.0
    %299 = vmatpush1.msra.mxu0 %v274
    %300 = vmatprep.subr.mxu0 0.0
    %301 = vmatpush1.msra.mxu0 %v275
    %302 = vmatprep.subr.mxu0 0.0
    %303 = vmatpush1.msra.mxu0 %v276
    %304 = vmatprep.subr.mxu0 0.0
    %305 = vmatpush1.msra.mxu0 %v277
    %306 = vmatprep.subr.mxu0 0.0
    %307 = vmatpush1.msra.mxu0 %v278
    %308 = vmatprep.subr.mxu0 0.0
    %309 = vmatpush1.msra.mxu0 %v279
    %310 = vmatprep.subr.mxu0 0.0
    %311 = vmatpush1.msra.mxu0 %v280
    %312 = vmatprep.subr.mxu0 0.0
    %313 = vmatpush1.msra.mxu0 %v281
    %314 = vmatprep.subr.mxu0 0.0
    %315 = vmatpush1.msra.mxu0 0.0
    %316 = vmatprep.subr.mxu0 0.0
    %317 = vmatpush1.msra.mxu0 0.0
    %318 = vmatprep.subr.mxu0 0.0
    %319 = vmatpush1.msra.mxu0 0.0
    %320 = vmatprep.subr.mxu0 0.0
    %321 = vmatpush1.msra.mxu0 0.0
    %322 = vmatprep.subr.mxu0 0.0
    %323 = vmatpush1.msra.mxu0 0.0
    %324 = vmatprep.subr.mxu0 0.0
    %325 = vmatpush1.msra.mxu0 0.0
    %326 = vmatprep.subr.mxu0 0.0
    %327 = vmatpush1.msra.mxu0 0.0
    %328 = vmatprep.subr.mxu0 0.0
    %329 = vmatpush1.msra.mxu0 0.0
    %330 = vmatprep.subr.mxu0 0.0
    %331 = vmatpush1.msra.mxu0 0.0
    %332 = vmatprep.subr.mxu0 0.0
    %333 = vmatpush1.msra.mxu0 0.0
    %334 = vmatprep.subr.mxu0 0.0
    %335 = vmatpush1.msra.mxu0 0.0
    %336 = vmatprep.subr.mxu0 0.0
    %337 = vmatpush1.msra.mxu0 0.0
    %338 = vmatprep.subr.mxu0 0.0
    %339 = vmatpush1.msra.mxu0 0.0
    %340 = vmatprep.subr.mxu0 0.0
    %341 = vmatpush1.msra.mxu0 0.0
    %342 = vmatprep.subr.mxu0 0.0
    %343 = vmatpush1.msra.mxu0 0.0
    %344 = vmatprep.subr.mxu0 0.0
    %345 = vmatpush1.msra.mxu0 0.0
    %346 = vmatprep.mubr.f32.mxu0 0.0
    %347 = vmatmul.mubr.f32.gmra.mrb[0].mxu0 %v264
    %v348 = vpop.f32.mrb[0].mxu0
    %v349 = vadd.f32 %v192, %v348
    %v350 = vpop.f32.mrb[0].mxu0
    %351 = vdwg.mxu0
    %v352 = vmax.f32 %v349, 0.0
    %353 = vst [vmem:[#allocation8 + $0x1] sm:$0x1] %v352
    %s354 = scalar_lea.vmem [#allocation7], 128
    %v355 = vld [vmem:[%s354] sm:$0xff]
    %v356 = vld [vmem:[%s354 + $0x8] sm:$0xff]
    %v357 = vld [vmem:[%s354 + $0x10] sm:$0xff]
    %v358 = vld [vmem:[%s354 + $0x18] sm:$0xff]
    %v359 = vld [vmem:[%s354 + $0x20] sm:$0xff]
    %v360 = vld [vmem:[%s354 + $0x28] sm:$0xff]
    %v361 = vld [vmem:[%s354 + $0x30] sm:$0xff]
    %v362 = vld [vmem:[%s354 + $0x38] sm:$0xff]
    %v363 = vld [vmem:[%s354 + $0x40] sm:$0xff]
    %v364 = vld [vmem:[%s354 + $0x48] sm:$0xff]
    %v365 = vld [vmem:[%s354 + $0x50] sm:$0xff]
    %v366 = vld [vmem:[%s354 + $0x58] sm:$0xff]
    %v367 = vld [vmem:[%s354 + $0x60] sm:$0xff]
    %v368 = vld [vmem:[%s354 + $0x68] sm:$0xff]
    %v369 = vld [vmem:[%s354 + $0x70] sm:$0xff]
    %v370 = vld [vmem:[%s354 + $0x78] sm:$0xff]
    %371 = vmatprep.subr.mxu0 0.0
    %372 = vmatpush1.msra.mxu0 %v355
    %373 = vmatprep.subr.mxu0 0.0
    %374 = vmatpush1.msra.mxu0 %v356
    %375 = vmatprep.subr.mxu0 0.0
    %376 = vmatpush1.msra.mxu0 %v357
    %377 = vmatprep.subr.mxu0 0.0
    %378 = vmatpush1.msra.mxu0 %v358
    %379 = vmatprep.subr.mxu0 0.0
    %380 = vmatpush1.msra.mxu0 %v359
    %381 = vmatprep.subr.mxu0 0.0
    %382 = vmatpush1.msra.mxu0 %v360
    %383 = vmatprep.subr.mxu0 0.0
    %384 = vmatpush1.msra.mxu0 %v361
    %385 = vmatprep.subr.mxu0 0.0
    %386 = vmatpush1.msra.mxu0 %v362
    %387 = vmatprep.subr.mxu0 0.0
    %388 = vmatpush1.msra.mxu0 %v363
    %389 = vmatprep.subr.mxu0 0.0
    %390 = vmatpush1.msra.mxu0 %v364
    %391 = vmatprep.subr.mxu0 0.0
    %392 = vmatpush1.msra.mxu0 %v365
    %393 = vmatprep.subr.mxu0 0.0
    %394 = vmatpush1.msra.mxu0 %v366
    %395 = vmatprep.subr.mxu0 0.0
    %396 = vmatpush1.msra.mxu0 %v367
    %397 = vmatprep.subr.mxu0 0.0
    %398 = vmatpush1.msra.mxu0 %v368
    %399 = vmatprep.subr.mxu0 0.0
    %400 = vmatpush1.msra.mxu0 %v369
    %401 = vmatprep.subr.mxu0 0.0
    %402 = vmatpush1.msra.mxu0 %v370
    %403 = vmatprep.subr.mxu0 0.0
    %404 = vmatpush1.msra.mxu0 0.0
    %405 = vmatprep.subr.mxu0 0.0
    %406 = vmatpush1.msra.mxu0 0.0
    %407 = vmatprep.subr.mxu0 0.0
    %408 = vmatpush1.msra.mxu0 0.0
    %409 = vmatprep.subr.mxu0 0.0
    %410 = vmatpush1.msra.mxu0 0.0
    %411 = vmatprep.subr.mxu0 0.0
    %412 = vmatpush1.msra.mxu0 0.0
    %413 = vmatprep.subr.mxu0 0.0
    %414 = vmatpush1.msra.mxu0 0.0
    %415 = vmatprep.subr.mxu0 0.0
    %416 = vmatpush1.msra.mxu0 0.0
    %417 = vmatprep.subr.mxu0 0.0
    %418 = vmatpush1.msra.mxu0 0.0
    %419 = vmatprep.subr.mxu0 0.0
    %420 = vmatpush1.msra.mxu0 0.0
    %421 = vmatprep.subr.mxu0 0.0
    %422 = vmatpush1.msra.mxu0 0.0
    %423 = vmatprep.subr.mxu0 0.0
    %424 = vmatpush1.msra.mxu0 0.0
    %425 = vmatprep.subr.mxu0 0.0
    %426 = vmatpush1.msra.mxu0 0.0
    %427 = vmatprep.subr.mxu0 0.0
    %428 = vmatpush1.msra.mxu0 0.0
    %429 = vmatprep.subr.mxu0 0.0
    %430 = vmatpush1.msra.mxu0 0.0
    %431 = vmatprep.subr.mxu0 0.0
    %432 = vmatpush1.msra.mxu0 0.0
    %433 = vmatprep.subr.mxu0 0.0
    %434 = vmatpush1.msra.mxu0 0.0
    %435 = vmatprep.mubr.f32.mxu0 0.0
    %436 = vmatmul.mubr.f32.gmra.mrb[0].mxu0 %v352
    %v437 = vpop.f32.mrb[0].mxu0
    %v438 = vadd.f32 %v261, %v437
    %v439 = vpop.f32.mrb[0].mxu0
    %440 = vdwg.mxu0
    %v441 = vmax.f32 %v438, 0.0
    %442 = vst [vmem:[#allocation8 + $0x2] sm:$0x1] %v441
    // Predicated region
    $region30: #{tpu_custom_call.1} parent=1 // pred_check
      _
    $region31: #{tpu_custom_call.1} parent=1 // pred_check_branch
      %444 = sbr.rel (0) target = $region33
    $region32: #{tpu_custom_call.1} parent=1 // pred_region
      %s446 = ssub.s32 64, 64
      %447 = vsyncadd [#allocation4], %s446
      %s449 = sshll.u32 [#allocation8], 4
      %s450 = int_to_ptr.vmem [resolvable:$true] %s449
      %452 = dma.vmem_to_hbm [thread:$0]  %s450, 64, %s4, [#allocation4]
    $region33: #{tpu_custom_call.1} parent=1 // pred_fallthru
      _
    // Predicated region
    $region34: #{tpu_custom_call.1} parent=1 // pred_check
      _
    $region35: #{tpu_custom_call.1} parent=1 // pred_check_branch
      %454 = sbr.rel (0) target = $region37
    $region36: #{tpu_custom_call.1} parent=1 // pred_region
      %455 = dma.done [#allocation4], 64
    $region37: #{tpu_custom_call.1} parent=1 // pred_fallthru
      _
    %456 = vsyncpa [#allocation3], 1
    %457 = vsyncpa [#allocation6], 1
    %458 = vsyncpa [#allocation4], 1

</llo_original>
